<compile_context>
chip_gen: v7x
topology: tpu7x:2x2x1
jax: 0.10.0
libtpu: 0.0.40
codegen_flags: <defaults>
</compile_context>

<pallas_src>
import math
import functools

import jax
import jax.numpy as jnp
from jax.experimental import pallas as pl
from jax.experimental.pallas import tpu as pltpu

_LANES = 128          # lane-dense output width (multiple of 128)
_MAX_BLOCK_M = 2048   # rows per grid step (review: 1024-2048 ~ HBM roofline)


def _cdiv(a, b):
    return -(-a // b)


def _round_up(x, m):
    return ((x + m - 1) // m) * m


def _sublanes_for(dtype):
    """Min second-to-last tile granularity: 8 (f32), 16 (bf16), 32 (8-bit)."""
    itemsize = jnp.dtype(dtype).itemsize
    return 8 * max(1, 4 // itemsize)


def _place_lanes(a, offset, lanes=_LANES):
    """Zero-pad a 2D array into lane range [offset, offset + a.shape[-1])."""
    return jnp.pad(a, ((0, 0), (offset, lanes - offset - a.shape[-1])))


def _fused_linear_kernel(x1_ref, x2_ref, x3_ref,
                         w1_ref, w2_ref, w3_ref, b_ref,
                         y_ref):
    """One grid step computes block_m rows of all three linears.

    x*_ref: [block_m, K]    (K = 3 / 5 / 7, native width)
    w*_ref: [K, 128]        (pre-transposed, pre-placed into disjoint lanes)
    b_ref : [1, 128]        (b1 at lanes 0:4, b3 at lanes 10:18, zeros else)
    y_ref : [block_m, 128]  single lane-dense slab: y1|y2|y3 at lanes 0:18
    """
    acc = jnp.dot(x1_ref[...], w1_ref[...], preferred_element_type=jnp.float32)
    acc = acc + jnp.dot(x2_ref[...], w2_ref[...],
                        preferred_element_type=jnp.float32)
    acc = acc + jnp.dot(x3_ref[...], w3_ref[...],
                        preferred_element_type=jnp.float32)
    y_ref[...] = (acc + b_ref[...]).astype(y_ref.dtype)


def fused_linear3(x1, x2, x3, w1p, w2p, w3p, bp, *, n1, n2, n3):
    """Fused equivalent of three torch.nn.functional.linear calls.

    x*:  [..., K*]   inputs with feature dim last (PyTorch layout)
    w*p: [K*, 128]   pre-transposed weights, placed at disjoint lane offsets
    bp:  [1, 128]    combined lane-placed biases
    n*:  true out_features (static Python ints)
    """
    lead1, k1 = x1.shape[:-1], x1.shape[-1]
    lead2, k2 = x2.shape[:-1], x2.shape[-1]
    lead3, k3 = x3.shape[:-1], x3.shape[-1]
    m1, m2, m3 = math.prod(lead1), math.prod(lead2), math.prod(lead3)

    out_dtype = jnp.result_type(x1.dtype, x2.dtype, x3.dtype)
    sublanes = _sublanes_for(out_dtype)

    # Common padded row count so one grid covers all three matmuls.
    m_max = max(m1, m2, m3)
    nb = _cdiv(m_max, _MAX_BLOCK_M)          # minimal-padding block count
    if m_max >= 2 * sublanes:
        nb = max(nb, 2)                      # >=2 row blocks -> v7x megacore
    block_m = _round_up(_cdiv(m_max, nb), sublanes)
    mp = nb * block_m
    grid = (nb,)

    def pad_rows(x2d):
        m = x2d.shape[0]
        return x2d if m == mp else jnp.pad(x2d, ((0, mp - m), (0, 0)))

    x1p = pad_rows(x1.reshape(m1, k1))
    x2p = pad_rows(x2.reshape(m2, k2))
    x3p = pad_rows(x3.reshape(m3, k3))

    row_tiled = lambda k: pl.BlockSpec((block_m, k), lambda i: (i, 0))
    resident = lambda r: pl.BlockSpec((r, _LANES), lambda i: (0, 0))

    in_specs = [
        row_tiled(k1), row_tiled(k2), row_tiled(k3),  # activations: row-tiled
        resident(k1), resident(k2), resident(k3),     # lane-placed weights
        resident(1),                                   # combined bias
    ]
    out_specs = pl.BlockSpec((block_m, _LANES), lambda i: (i, 0))
    out_shape = jax.ShapeDtypeStruct((mp, _LANES), out_dtype)

    yp = pl.pallas_call(
        _fused_linear_kernel,
        out_shape=out_shape,
        grid=grid,
        in_specs=in_specs,
        out_specs=out_specs,
        compiler_params=pltpu.CompilerParams(
            dimension_semantics=("parallel",),   # row blocks shard across TCs
            vmem_limit_bytes=32 * 1024 * 1024,   # >> double-buffered footprint
        ),
    )(x1p, x2p, x3p, w1p, w2p, w3p, bp)

    # Lane-slice the single slab back into the three true-N outputs.
    y1 = yp[:m1, 0:n1].reshape(*lead1, n1)
    y2 = yp[:m2, n1:n1 + n2].reshape(*lead2, n2)
    y3 = yp[:m3, n1 + n2:n1 + n2 + n3].reshape(*lead3, n3)
    return y1, y2, y3


class PallasModel:
    """Deterministic-parameter version of the PyTorch Model (3 Linear layers)."""

    def __init__(self, key):
        k = jax.random.split(key, 5)
        # PyTorch nn.Linear weight layout: [out_features, in_features]
        self.w1 = jax.random.normal(k[0], (4, 3), jnp.float32) * 0.1
        self.b1 = jax.random.normal(k[1], (4,), jnp.float32) * 0.1
        self.w2 = jax.random.normal(k[2], (6, 5), jnp.float32) * 0.1
        self.w3 = jax.random.normal(k[3], (8, 7), jnp.float32) * 0.1
        self.b3 = jax.random.normal(k[4], (8,), jnp.float32) * 0.1
        self.n1, self.n2, self.n3 = 4, 6, 8

        # Hoisted ONCE at init: transpose to [K, N] and place each weight's
        # output lanes at its offset in the combined 128-lane output slab:
        #   y1 -> lanes [0, 4), y2 -> lanes [4, 10), y3 -> lanes [10, 18).
        off2 = self.n1
        off3 = self.n1 + self.n2
        self.w1p = _place_lanes(self.w1.T, 0)        # [3, 128]
        self.w2p = _place_lanes(self.w2.T, off2)     # [5, 128]
        self.w3p = _place_lanes(self.w3.T, off3)     # [7, 128]
        self.bp = (_place_lanes(self.b1[None, :], 0)
                   + _place_lanes(self.b3[None, :], off3))   # [1, 128]

        # n1/n2/n3 are closed over as static constants; padding/slicing fuses
        # around the single pallas_call under jit.
        self._forward = jax.jit(
            functools.partial(fused_linear3, n1=self.n1, n2=self.n2, n3=self.n3)
        )

    def __call__(self, x1, x2, x3):
        return self._forward(x1, x2, x3,
                             self.w1p, self.w2p, self.w3p, self.bp)


if __name__ == "__main__":
    key = jax.random.PRNGKey(0)
    kp, kx1, kx2, kx3 = jax.random.split(key, 4)

    model = PallasModel(kp)

    # Small shapes consistent with the module's in_features (3, 5, 7).
    x1 = jax.random.normal(kx1, (4, 3), jnp.float32)       # 2D -> GEMM path
    x2 = jax.random.normal(kx2, (2, 4, 5), jnp.float32)    # 3D -> MatMul path
    x3 = jax.random.normal(kx3, (2, 4, 7), jnp.float32)    # 3D -> MatMul path

    y1, y2, y3 = model(x1, x2, x3)
    jax.block_until_ready((y1, y2, y3))

    # Reference check against plain JAX (same semantics as torch.nn.Linear).
    r1 = x1 @ model.w1.T + model.b1
    r2 = x2 @ model.w2.T
    r3 = x3 @ model.w3.T + model.b3
    assert y1.shape == (4, 4) and y2.shape == (2, 4, 6) and y3.shape == (2, 4, 8)
    assert jnp.allclose(y1, r1, atol=1e-5)
    assert jnp.allclose(y2, r2, atol=1e-5)
    assert jnp.allclose(y3, r3, atol=1e-5)

    print("KERNEL_OK")
</pallas_src>

<mosaic_0001>
module attributes {stable_mosaic.version = 11 : i64} {
  func.func @_fused_linear_kernel(%arg0: i32, %arg1: memref<8x3xf32, #tpu.memory_space<vmem>>, %arg2: memref<8x5xf32, #tpu.memory_space<vmem>>, %arg3: memref<8x7xf32, #tpu.memory_space<vmem>>, %arg4: memref<3x128xf32, #tpu.memory_space<vmem>>, %arg5: memref<5x128xf32, #tpu.memory_space<vmem>>, %arg6: memref<7x128xf32, #tpu.memory_space<vmem>>, %arg7: memref<1x128xf32, #tpu.memory_space<vmem>>, %arg8: memref<8x128xf32, #tpu.memory_space<vmem>>) attributes {dimension_semantics = [#tpu.dimension_semantics<parallel>], iteration_bounds = array<i64: 1>, scalar_prefetch = 0 : i64, scratch_operands = 0 : i64, tpu.core_type = #tpu.core_type<tc>, window_params = [{transform_indices = @transform_0, window_bounds = array<i64: 8, 3>}, {transform_indices = @transform_1, window_bounds = array<i64: 8, 5>}, {transform_indices = @transform_2, window_bounds = array<i64: 8, 7>}, {pipeline_mode = #tpu.pipeline_mode<synchronous>, transform_indices = @transform_3, window_bounds = array<i64: 3, 128>}, {pipeline_mode = #tpu.pipeline_mode<synchronous>, transform_indices = @transform_4, window_bounds = array<i64: 5, 128>}, {pipeline_mode = #tpu.pipeline_mode<synchronous>, transform_indices = @transform_5, window_bounds = array<i64: 7, 128>}, {pipeline_mode = #tpu.pipeline_mode<synchronous>, transform_indices = @transform_6, window_bounds = array<i64: 1, 128>}, {transform_indices = @transform_7, window_bounds = array<i64: 8, 128>}]} {
    %c0 = arith.constant 0 : index
    %c0_0 = arith.constant 0 : index
    %0 = vector.load %arg1[%c0, %c0_0] : memref<8x3xf32, #tpu.memory_space<vmem>>, vector<8x3xf32>
    %c0_1 = arith.constant 0 : index
    %c0_2 = arith.constant 0 : index
    %1 = vector.load %arg4[%c0_1, %c0_2] : memref<3x128xf32, #tpu.memory_space<vmem>>, vector<3x128xf32>
    %cst = arith.constant dense<0.000000e+00> : vector<8x128xf32>
    %2 = tpu.matmul %0, %1, %cst {dimension_numbers = #tpu.dot_dimension_numbers<[1], [0], [0], [1], [0, 0, 1, 1], [], []>} : vector<8x3xf32>, vector<3x128xf32>, vector<8x128xf32> -> vector<8x128xf32>
    %c0_3 = arith.constant 0 : index
    %c0_4 = arith.constant 0 : index
    %3 = vector.load %arg2[%c0_3, %c0_4] : memref<8x5xf32, #tpu.memory_space<vmem>>, vector<8x5xf32>
    %c0_5 = arith.constant 0 : index
    %c0_6 = arith.constant 0 : index
    %4 = vector.load %arg5[%c0_5, %c0_6] : memref<5x128xf32, #tpu.memory_space<vmem>>, vector<5x128xf32>
    %cst_7 = arith.constant dense<0.000000e+00> : vector<8x128xf32>
    %5 = tpu.matmul %3, %4, %cst_7 {dimension_numbers = #tpu.dot_dimension_numbers<[1], [0], [0], [1], [0, 0, 1, 1], [], []>} : vector<8x5xf32>, vector<5x128xf32>, vector<8x128xf32> -> vector<8x128xf32>
    %6 = arith.addf %2, %5 : vector<8x128xf32>
    %c0_8 = arith.constant 0 : index
    %c0_9 = arith.constant 0 : index
    %7 = vector.load %arg3[%c0_8, %c0_9] : memref<8x7xf32, #tpu.memory_space<vmem>>, vector<8x7xf32>
    %c0_10 = arith.constant 0 : index
    %c0_11 = arith.constant 0 : index
    %8 = vector.load %arg6[%c0_10, %c0_11] : memref<7x128xf32, #tpu.memory_space<vmem>>, vector<7x128xf32>
    %cst_12 = arith.constant dense<0.000000e+00> : vector<8x128xf32>
    %9 = tpu.matmul %7, %8, %cst_12 {dimension_numbers = #tpu.dot_dimension_numbers<[1], [0], [0], [1], [0, 0, 1, 1], [], []>} : vector<8x7xf32>, vector<7x128xf32>, vector<8x128xf32> -> vector<8x128xf32>
    %10 = arith.addf %6, %9 : vector<8x128xf32>
    %c0_13 = arith.constant 0 : index
    %c0_14 = arith.constant 0 : index
    %11 = vector.load %arg7[%c0_13, %c0_14] : memref<1x128xf32, #tpu.memory_space<vmem>>, vector<1x128xf32>
    %12 = vector.broadcast %11 : vector<1x128xf32> to vector<8x128xf32>
    %13 = arith.addf %10, %12 : vector<8x128xf32>
    %c0_15 = arith.constant 0 : index
    %c0_16 = arith.constant 0 : index
    %14 = vector.load %arg8[%c0_15, %c0_16] : memref<8x128xf32, #tpu.memory_space<vmem>>, vector<8x128xf32>
    tpu.vector_store %arg8[%c0_15, %c0_16], %13 {strides = array<i32>} : memref<8x128xf32, #tpu.memory_space<vmem>>, vector<8x128xf32>,
    return
  }
  func.func @transform_0(%arg0: i32) -> (i32, i32) {
    %c0_i32 = arith.constant 0 : i32
    %c0_i32_0 = arith.constant 0 : i32
    return %arg0, %c0_i32 : i32, i32
  }
  func.func @transform_1(%arg0: i32) -> (i32, i32) {
    %c0_i32 = arith.constant 0 : i32
    %c0_i32_0 = arith.constant 0 : i32
    return %arg0, %c0_i32 : i32, i32
  }
  func.func @transform_2(%arg0: i32) -> (i32, i32) {
    %c0_i32 = arith.constant 0 : i32
    %c0_i32_0 = arith.constant 0 : i32
    return %arg0, %c0_i32 : i32, i32
  }
  func.func @transform_3(%arg0: i32) -> (i32, i32) {
    %c0_i32 = arith.constant 0 : i32
    %c0_i32_0 = arith.constant 0 : i32
    %c0_i32_1 = arith.constant 0 : i32
    return %c0_i32, %c0_i32_0 : i32, i32
  }
  func.func @transform_4(%arg0: i32) -> (i32, i32) {
    %c0_i32 = arith.constant 0 : i32
    %c0_i32_0 = arith.constant 0 : i32
    %c0_i32_1 = arith.constant 0 : i32
    return %c0_i32, %c0_i32_0 : i32, i32
  }
  func.func @transform_5(%arg0: i32) -> (i32, i32) {
    %c0_i32 = arith.constant 0 : i32
    %c0_i32_0 = arith.constant 0 : i32
    %c0_i32_1 = arith.constant 0 : i32
    return %c0_i32, %c0_i32_0 : i32, i32
  }
  func.func @transform_6(%arg0: i32) -> (i32, i32) {
    %c0_i32 = arith.constant 0 : i32
    %c0_i32_0 = arith.constant 0 : i32
    %c0_i32_1 = arith.constant 0 : i32
    return %c0_i32, %c0_i32_0 : i32, i32
  }
  func.func @transform_7(%arg0: i32) -> (i32, i32) {
    %c0_i32 = arith.constant 0 : i32
    %c0_i32_0 = arith.constant 0 : i32
    return %arg0, %c0_i32 : i32, i32
  }
}

</mosaic_0001>

<llo_original>
// kernel: fused_linear3.1
$region0: #{fused_linear3.1}
  #allocation0 [shape = 'u32[]', space=smem, size = 0x4, offset = 0x4, fixed_abs, tag = 'smem constant byte address 0x4 - core index']
  #allocation1 [shape = 'u32[144,128]{1,0:T(1,128)}', space=vmem, size = 0x12000, scoped, tag = 'internal scratch']
  %s0 = inlined_call_operand.vmem [shape: f32[8,3], index: 0, kind: input, shape index: {}]
  %s1 = inlined_call_operand.vmem [shape: f32[8,5], index: 1, kind: input, shape index: {}]
  %s2 = inlined_call_operand.vmem [shape: f32[8,7], index: 2, kind: input, shape index: {}]
  %s3 = inlined_call_operand.hbm [shape: f32[3,128], index: 3, kind: input, shape index: {}]
  %s4 = inlined_call_operand.vmem [shape: f32[5,128], index: 4, kind: input, shape index: {}]
  %s5 = inlined_call_operand.vmem [shape: f32[7,128], index: 5, kind: input, shape index: {}]
  %s6 = inlined_call_operand.vmem [shape: f32[1,128], index: 6, kind: input, shape index: {}]
  %s7 = inlined_call_operand.vmem [shape: f32[8,128], index: 7, kind: output, shape index: {}]
  %s8 = sld [smem:[#allocation0]]
  $region42: #{fused_linear3.1} parent=0
    _
  %s10 = ssub.s32 1, %s8
  %s11 = scalar_select 0, %s10, %s8
  $region1: #{fused_linear3.1} parent=0
    #allocation2 [shape = 'u8[2048]{0}', space=vmem, size = 0x800, scoped, tag = 'input window, operand 3, single buffered']
    #allocation3 [shape = 's32[1]{0}', space=sflag, size = 0x4, scoped, tag = 'scoped memory for fused_linear3.1']
    %12 = vsyncpa [#allocation3], 0
    // Predicated region
    $region2: #{fused_linear3.1} parent=1 // pred_check
      _
    $region3: #{fused_linear3.1} parent=1 // pred_check_branch
      %14 = sbr.rel (0) target = $region5
    $region4: #{fused_linear3.1} parent=1 // pred_region
      _
    $region5: #{fused_linear3.1} parent=1 // pred_fallthru
      _
    // Predicated region
    $region6: #{fused_linear3.1} parent=1 // pred_check
      _
    $region7: #{fused_linear3.1} parent=1 // pred_check_branch
      %16 = sbr.rel (0) target = $region9
    $region8: #{fused_linear3.1} parent=1 // pred_region
      _
    $region9: #{fused_linear3.1} parent=1 // pred_fallthru
      _
    // Predicated region
    $region10: #{fused_linear3.1} parent=1 // pred_check
      _
    $region11: #{fused_linear3.1} parent=1 // pred_check_branch
      %18 = sbr.rel (0) target = $region13
    $region12: #{fused_linear3.1} parent=1 // pred_region
      _
    $region13: #{fused_linear3.1} parent=1 // pred_fallthru
      _
    // Predicated region
    $region14: #{fused_linear3.1} parent=1 // pred_check
      _
    $region15: #{fused_linear3.1} parent=1 // pred_check_branch
      %20 = sbr.rel (0) target = $region17
    $region16: #{fused_linear3.1} parent=1 // pred_region
      %s22 = ssub.s32 64, 64
      %23 = vsyncadd [#allocation3], %s22
      %s25 = sshll.u32 [#allocation2], 4
      %s26 = int_to_ptr.vmem [resolvable:$true] %s25
      %28 = dma.hbm_to_vmem [thread:$0]  %s3, 64, %s26, [#allocation3]
    $region17: #{fused_linear3.1} parent=1 // pred_fallthru
      _
    // Predicated region
    $region18: #{fused_linear3.1} parent=1 // pred_check
      _
    $region19: #{fused_linear3.1} parent=1 // pred_check_branch
      %30 = sbr.rel (0) target = $region21
    $region20: #{fused_linear3.1} parent=1 // pred_region
      _
    $region21: #{fused_linear3.1} parent=1 // pred_fallthru
      _
    // Predicated region
    $region22: #{fused_linear3.1} parent=1 // pred_check
      _
    $region23: #{fused_linear3.1} parent=1 // pred_check_branch
      %32 = sbr.rel (0) target = $region25
    $region24: #{fused_linear3.1} parent=1 // pred_region
      _
    $region25: #{fused_linear3.1} parent=1 // pred_fallthru
      _
    // Predicated region
    $region26: #{fused_linear3.1} parent=1 // pred_check
      _
    $region27: #{fused_linear3.1} parent=1 // pred_check_branch
      %34 = sbr.rel (0) target = $region29
    $region28: #{fused_linear3.1} parent=1 // pred_region
      _
    $region29: #{fused_linear3.1} parent=1 // pred_fallthru
      _
    // Predicated region
    $region30: #{fused_linear3.1} parent=1 // pred_check
      _
    $region31: #{fused_linear3.1} parent=1 // pred_check_branch
      %36 = sbr.rel (0) target = $region33
    $region32: #{fused_linear3.1} parent=1 // pred_region
      %37 = dma.done [#allocation3], 64
    $region33: #{fused_linear3.1} parent=1 // pred_fallthru
      _
    %v38 = vld [vmem:[%s0] sm:$0xff]
    %v39 = vld [vmem:[#allocation2] sm:$0x7]
    %v40 = vld [vmem:[%s1] sm:$0xff]
    %v41 = vld [vmem:[%s4] sm:$0x1f]
    %vm42 = vcmask 39936
    %v44 = vsel %vm42, %v40, 0
    %vm46 = vcmask 1044480
    %v48 = vsel %vm46, %v41, 0
    %50 = vmatprep.subr.mxu0 0.0
    %51 = vmatpush1.msra.mxu0 %v48
    %52 = vmatprep.subr.mxu0 0.0
    %53 = vmatpush1.msra.mxu0 0.0
    %54 = vmatprep.subr.mxu0 0.0
    %55 = vmatpush1.msra.mxu0 0.0
    %56 = vmatprep.subr.mxu0 0.0
    %57 = vmatpush1.msra.mxu0 0.0
    %58 = vmatprep.subr.mxu0 0.0
    %59 = vmatpush1.msra.mxu0 0.0
    %60 = vmatprep.subr.mxu0 0.0
    %61 = vmatpush1.msra.mxu0 0.0
    %62 = vmatprep.subr.mxu0 0.0
    %63 = vmatpush1.msra.mxu0 0.0
    %64 = vmatprep.subr.mxu0 0.0
    %65 = vmatpush1.msra.mxu0 0.0
    %66 = vmatprep.subr.mxu0 0.0
    %67 = vmatpush1.msra.mxu0 0.0
    %68 = vmatprep.subr.mxu0 0.0
    %69 = vmatpush1.msra.mxu0 0.0
    %70 = vmatprep.subr.mxu0 0.0
    %71 = vmatpush1.msra.mxu0 0.0
    %72 = vmatprep.subr.mxu0 0.0
    %73 = vmatpush1.msra.mxu0 0.0
    %74 = vmatprep.subr.mxu0 0.0
    %75 = vmatpush1.msra.mxu0 0.0
    %76 = vmatprep.subr.mxu0 0.0
    %77 = vmatpush1.msra.mxu0 0.0
    %78 = vmatprep.subr.mxu0 0.0
    %79 = vmatpush1.msra.mxu0 0.0
    %80 = vmatprep.subr.mxu0 0.0
    %81 = vmatpush1.msra.mxu0 0.0
    %82 = vmatprep.subr.mxu0 0.0
    %83 = vmatpush1.msra.mxu0 0.0
    %84 = vmatprep.subr.mxu0 0.0
    %85 = vmatpush1.msra.mxu0 0.0
    %86 = vmatprep.subr.mxu0 0.0
    %87 = vmatpush1.msra.mxu0 0.0
    %88 = vmatprep.subr.mxu0 0.0
    %89 = vmatpush1.msra.mxu0 0.0
    %90 = vmatprep.subr.mxu0 0.0
    %91 = vmatpush1.msra.mxu0 0.0
    %92 = vmatprep.subr.mxu0 0.0
    %93 = vmatpush1.msra.mxu0 0.0
    %94 = vmatprep.subr.mxu0 0.0
    %95 = vmatpush1.msra.mxu0 0.0
    %96 = vmatprep.subr.mxu0 0.0
    %97 = vmatpush1.msra.mxu0 0.0
    %98 = vmatprep.subr.mxu0 0.0
    %99 = vmatpush1.msra.mxu0 0.0
    %100 = vmatprep.subr.mxu0 0.0
    %101 = vmatpush1.msra.mxu0 0.0
    %102 = vmatprep.subr.mxu0 0.0
    %103 = vmatpush1.msra.mxu0 0.0
    %104 = vmatprep.subr.mxu0 0.0
    %105 = vmatpush1.msra.mxu0 0.0
    %106 = vmatprep.subr.mxu0 0.0
    %107 = vmatpush1.msra.mxu0 0.0
    %108 = vmatprep.subr.mxu0 0.0
    %109 = vmatpush1.msra.mxu0 0.0
    %110 = vmatprep.subr.mxu0 0.0
    %111 = vmatpush1.msra.mxu0 0.0
    %112 = vmatprep.subr.mxu0 0.0
    %113 = vmatpush1.msra.mxu0 0.0
    %114 = vmatprep.mubr.f32.mxu0 0.0
    %115 = vmatmul.mubr.f32.gmra.mrb[0].mxu0 %v44
    %v116 = vpop.f32.mrb[0].mxu0
    %v117 = vadd.f32 0.0, %v116
    %v118 = vpop.f32.mrb[0].mxu0
    %119 = vdwg.mxu0
    %vm120 = vcmask 23552
    %v122 = vsel %vm120, %v38, 0
    %vm124 = vcmask 1042432
    %v126 = vsel %vm124, %v39, 0
    %128 = vmatprep.subr.mxu0 0.0
    %129 = vmatpush1.msra.mxu0 %v126
    %130 = vmatprep.subr.mxu0 0.0
    %131 = vmatpush1.msra.mxu0 0.0
    %132 = vmatprep.subr.mxu0 0.0
    %133 = vmatpush1.msra.mxu0 0.0
    %134 = vmatprep.subr.mxu0 0.0
    %135 = vmatpush1.msra.mxu0 0.0
    %136 = vmatprep.subr.mxu0 0.0
    %137 = vmatpush1.msra.mxu0 0.0
    %138 = vmatprep.subr.mxu0 0.0
    %139 = vmatpush1.msra.mxu0 0.0
    %140 = vmatprep.subr.mxu0 0.0
    %141 = vmatpush1.msra.mxu0 0.0
    %142 = vmatprep.subr.mxu0 0.0
    %143 = vmatpush1.msra.mxu0 0.0
    %144 = vmatprep.subr.mxu0 0.0
    %145 = vmatpush1.msra.mxu0 0.0
    %146 = vmatprep.subr.mxu0 0.0
    %147 = vmatpush1.msra.mxu0 0.0
    %148 = vmatprep.subr.mxu0 0.0
    %149 = vmatpush1.msra.mxu0 0.0
    %150 = vmatprep.subr.mxu0 0.0
    %151 = vmatpush1.msra.mxu0 0.0
    %152 = vmatprep.subr.mxu0 0.0
    %153 = vmatpush1.msra.mxu0 0.0
    %154 = vmatprep.subr.mxu0 0.0
    %155 = vmatpush1.msra.mxu0 0.0
    %156 = vmatprep.subr.mxu0 0.0
    %157 = vmatpush1.msra.mxu0 0.0
    %158 = vmatprep.subr.mxu0 0.0
    %159 = vmatpush1.msra.mxu0 0.0
    %160 = vmatprep.subr.mxu0 0.0
    %161 = vmatpush1.msra.mxu0 0.0
    %162 = vmatprep.subr.mxu0 0.0
    %163 = vmatpush1.msra.mxu0 0.0
    %164 = vmatprep.subr.mxu0 0.0
    %165 = vmatpush1.msra.mxu0 0.0
    %166 = vmatprep.subr.mxu0 0.0
    %167 = vmatpush1.msra.mxu0 0.0
    %168 = vmatprep.subr.mxu0 0.0
    %169 = vmatpush1.msra.mxu0 0.0
    %170 = vmatprep.subr.mxu0 0.0
    %171 = vmatpush1.msra.mxu0 0.0
    %172 = vmatprep.subr.mxu0 0.0
    %173 = vmatpush1.msra.mxu0 0.0
    %174 = vmatprep.subr.mxu0 0.0
    %175 = vmatpush1.msra.mxu0 0.0
    %176 = vmatprep.subr.mxu0 0.0
    %177 = vmatpush1.msra.mxu0 0.0
    %178 = vmatprep.subr.mxu0 0.0
    %179 = vmatpush1.msra.mxu0 0.0
    %180 = vmatprep.subr.mxu0 0.0
    %181 = vmatpush1.msra.mxu0 0.0
    %182 = vmatprep.subr.mxu0 0.0
    %183 = vmatpush1.msra.mxu0 0.0
    %184 = vmatprep.subr.mxu0 0.0
    %185 = vmatpush1.msra.mxu0 0.0
    %186 = vmatprep.subr.mxu0 0.0
    %187 = vmatpush1.msra.mxu0 0.0
    %188 = vmatprep.subr.mxu0 0.0
    %189 = vmatpush1.msra.mxu0 0.0
    %190 = vmatprep.subr.mxu0 0.0
    %191 = vmatpush1.msra.mxu0 0.0
    %192 = vmatprep.mubr.f32.mxu0 0.0
    %193 = vmatmul.mubr.f32.gmra.mrb[0].mxu0 %v122
    %v194 = vpop.f32.mrb[0].mxu0
    %v195 = vadd.f32 %v117, %v194
    %v196 = vpop.f32.mrb[0].mxu0
    %197 = vdwg.mxu0
    %v198 = vld [vmem:[%s2] sm:$0xff]
    %v199 = vld [vmem:[%s5] sm:$0x7f]
    %vm200 = vcmask 56320
    %v202 = vsel %vm200, %v198, 0
    %vm204 = vcmask 1046528
    %v206 = vsel %vm204, %v199, 0
    %208 = vmatprep.subr.mxu0 0.0
    %209 = vmatpush1.msra.mxu0 %v206
    %210 = vmatprep.subr.mxu0 0.0
    %211 = vmatpush1.msra.mxu0 0.0
    %212 = vmatprep.subr.mxu0 0.0
    %213 = vmatpush1.msra.mxu0 0.0
    %214 = vmatprep.subr.mxu0 0.0
    %215 = vmatpush1.msra.mxu0 0.0
    %216 = vmatprep.subr.mxu0 0.0
    %217 = vmatpush1.msra.mxu0 0.0
    %218 = vmatprep.subr.mxu0 0.0
    %219 = vmatpush1.msra.mxu0 0.0
    %220 = vmatprep.subr.mxu0 0.0
    %221 = vmatpush1.msra.mxu0 0.0
    %222 = vmatprep.subr.mxu0 0.0
    %223 = vmatpush1.msra.mxu0 0.0
    %224 = vmatprep.subr.mxu0 0.0
    %225 = vmatpush1.msra.mxu0 0.0
    %226 = vmatprep.subr.mxu0 0.0
    %227 = vmatpush1.msra.mxu0 0.0
    %228 = vmatprep.subr.mxu0 0.0
    %229 = vmatpush1.msra.mxu0 0.0
    %230 = vmatprep.subr.mxu0 0.0
    %231 = vmatpush1.msra.mxu0 0.0
    %232 = vmatprep.subr.mxu0 0.0
    %233 = vmatpush1.msra.mxu0 0.0
    %234 = vmatprep.subr.mxu0 0.0
    %235 = vmatpush1.msra.mxu0 0.0
    %236 = vmatprep.subr.mxu0 0.0
    %237 = vmatpush1.msra.mxu0 0.0
    %238 = vmatprep.subr.mxu0 0.0
    %239 = vmatpush1.msra.mxu0 0.0
    %240 = vmatprep.subr.mxu0 0.0
    %241 = vmatpush1.msra.mxu0 0.0
    %242 = vmatprep.subr.mxu0 0.0
    %243 = vmatpush1.msra.mxu0 0.0
    %244 = vmatprep.subr.mxu0 0.0
    %245 = vmatpush1.msra.mxu0 0.0
    %246 = vmatprep.subr.mxu0 0.0
    %247 = vmatpush1.msra.mxu0 0.0
    %248 = vmatprep.subr.mxu0 0.0
    %249 = vmatpush1.msra.mxu0 0.0
    %250 = vmatprep.subr.mxu0 0.0
    %251 = vmatpush1.msra.mxu0 0.0
    %252 = vmatprep.subr.mxu0 0.0
    %253 = vmatpush1.msra.mxu0 0.0
    %254 = vmatprep.subr.mxu0 0.0
    %255 = vmatpush1.msra.mxu0 0.0
    %256 = vmatprep.subr.mxu0 0.0
    %257 = vmatpush1.msra.mxu0 0.0
    %258 = vmatprep.subr.mxu0 0.0
    %259 = vmatpush1.msra.mxu0 0.0
    %260 = vmatprep.subr.mxu0 0.0
    %261 = vmatpush1.msra.mxu0 0.0
    %262 = vmatprep.subr.mxu0 0.0
    %263 = vmatpush1.msra.mxu0 0.0
    %264 = vmatprep.subr.mxu0 0.0
    %265 = vmatpush1.msra.mxu0 0.0
    %266 = vmatprep.subr.mxu0 0.0
    %267 = vmatpush1.msra.mxu0 0.0
    %268 = vmatprep.subr.mxu0 0.0
    %269 = vmatpush1.msra.mxu0 0.0
    %270 = vmatprep.subr.mxu0 0.0
    %271 = vmatpush1.msra.mxu0 0.0
    %272 = vmatprep.mubr.f32.mxu0 0.0
    %273 = vmatmul.mubr.f32.gmra.mrb[0].mxu0 %v202
    %v274 = vpop.f32.mrb[0].mxu0
    %v275 = vadd.f32 0.0, %v274
    %v276 = vpop.f32.mrb[0].mxu0
    %277 = vdwg.mxu0
    %v278 = vadd.f32 %v195, %v275
    %v279 = vld [vmem:[%s6] sm:$0x1]
    %v281 = vlaneseq
    %v282 = vshrl.u32 %v281, 7
    %v283 = vsub.s32 0, %v282
    %v284 = vrot.slane %v279, %v283
    %v286 = vadd.f32 %v278, %v284
    %287 = vst [vmem:[%s7] sm:$0xff] %v286
    // Predicated region
    $region34: #{fused_linear3.1} parent=1 // pred_check
      _
    $region35: #{fused_linear3.1} parent=1 // pred_check_branch
      %289 = sbr.rel (0) target = $region37
    $region36: #{fused_linear3.1} parent=1 // pred_region
      _
    $region37: #{fused_linear3.1} parent=1 // pred_fallthru
      _
    // Predicated region
    $region38: #{fused_linear3.1} parent=1 // pred_check
      _
    $region39: #{fused_linear3.1} parent=1 // pred_check_branch
      %291 = sbr.rel (0) target = $region41
    $region40: #{fused_linear3.1} parent=1 // pred_region
      _
    $region41: #{fused_linear3.1} parent=1 // pred_fallthru
      _
    %292 = vsyncpa [#allocation3], 1

</llo_original>
